<compile_context>
chip_gen: v5e
topology: v5e:2x2
jax: 0.10.0
libtpu: 0.0.40
codegen_flags: <defaults>
</compile_context>

<pallas_src>
import math

import jax
import jax.numpy as jnp
from jax.experimental import pallas as pl
from jax.experimental.pallas import tpu as pltpu

BN_EPS = 1e-5
LANE = 128


def _round_up(n, m):
    return ((n + m - 1) // m) * m


def _cdiv(a, b):
    return -(-a // b)


# ----------------------------- kernel -----------------------------------

def _mlp_kernel(x_ref, w1_ref, b1_ref, w2_ref, b2_ref, w3_ref, b3_ref, o_ref):
    # x_ref: (TB, Din) f32 -> cast to bf16 in-kernel (no standalone XLA convert)
    x = x_ref[...].astype(jnp.bfloat16)

    # Linear1 (BN folded into w1/b1) + ReLU      (Dropout = identity, eval)
    h1 = jnp.dot(x, w1_ref[...], preferred_element_type=jnp.float32) + b1_ref[...]
    h1 = jnp.maximum(h1, 0.0)

    # Linear2 + ReLU                              (Dropout = identity, eval)
    h2 = jnp.dot(h1.astype(jnp.bfloat16), w2_ref[...],
                 preferred_element_type=jnp.float32) + b2_ref[...]
    h2 = jnp.maximum(h2, 0.0)

    # Linear3: compute on the 128-lane padded slab, store only the real columns
    out = jnp.dot(h2.astype(jnp.bfloat16), w3_ref[...],
                  preferred_element_type=jnp.float32) + b3_ref[...]
    o_ref[...] = out[:, : o_ref.shape[1]].astype(o_ref.dtype)


# --------------------- parameter prep (offline) --------------------------

def prepare_params(raw, *, eps=BN_EPS, lane=LANE):
    """Fold BatchNorm into Linear1 and zero-pad feature dims to 128 lanes.

    raw (all f32): bn_gamma/bn_beta/bn_mean/bn_var (1, Din),
                   w1 (Din, H1), b1 (1, H1), w2 (H1, H2), b2 (1, H2),
                   w3 (H2, Dout), b3 (1, Dout)
    """
    s = raw["bn_gamma"] * jax.lax.rsqrt(raw["bn_var"] + eps)          # (1, Din)
    w1f = raw["w1"] * s.T                                              # scale rows
    b1f = raw["b1"] + (raw["bn_beta"] - raw["bn_mean"] * s) @ raw["w1"]

    Din, H1 = raw["w1"].shape
    H2 = raw["w2"].shape[1]
    Do = raw["w3"].shape[1]
    H1P, H2P, DoP = _round_up(H1, lane), _round_up(H2, lane), _round_up(Do, lane)

    def pad2(a, r, c):
        return jnp.pad(a, ((0, r - a.shape[0]), (0, c - a.shape[1])))

    return dict(
        w1=pad2(w1f, Din, H1P).astype(jnp.bfloat16),
        b1=pad2(b1f, 1, H1P).astype(jnp.float32),
        w2=pad2(raw["w2"], H1P, H2P).astype(jnp.bfloat16),
        b2=pad2(raw["b2"], 1, H2P).astype(jnp.float32),
        w3=pad2(raw["w3"], H2P, DoP).astype(jnp.bfloat16),
        b3=pad2(raw["b3"], 1, DoP).astype(jnp.float32),
        out_dim=Do,
    )


# ------------------------------ wrapper ----------------------------------

def _x_map(i):
    return (i, 0)


def _resident_map(i):
    return (0, 0)


def _batch_tiling(B, tb_max=512):
    """Pick (TB, grid_len). TB is a multiple of 16 (bf16 sublane pack).

    For B > 256, use an even number (>=2) of near-equal tiles so v7x's two
    TensorCores get balanced work (no-op on single-TC v5e/v6e); for small B a
    single tile avoids per-grid-step overhead. Ragged last block is masked by
    Pallas, so no host-side padding is needed.
    """
    if B <= 256:
        n_tiles = 1
    else:
        n_tiles = max(2, _cdiv(B, tb_max))
        if n_tiles % 2:
            n_tiles += 1
    tb = _round_up(_cdiv(B, n_tiles), 16)
    return tb, _cdiv(B, tb)


def model_simplex_short_forward(x, fp, *, tb_max=512):
    """x: (B, input_dim) float32. fp: output of prepare_params."""
    B, Din = x.shape
    Do = fp["out_dim"]
    H1P = fp["w1"].shape[1]
    H2P = fp["w2"].shape[1]
    DoP = fp["w3"].shape[1]

    TB, n_grid = _batch_tiling(B, tb_max)

    in_specs = [
        pl.BlockSpec((TB, Din), _x_map),
        pl.BlockSpec(fp["w1"].shape, _resident_map),
        pl.BlockSpec(fp["b1"].shape, _resident_map),
        pl.BlockSpec(fp["w2"].shape, _resident_map),
        pl.BlockSpec(fp["b2"].shape, _resident_map),
        pl.BlockSpec(fp["w3"].shape, _resident_map),
        pl.BlockSpec(fp["b3"].shape, _resident_map),
    ]
    out_spec = pl.BlockSpec((TB, Do), _x_map)

    weight_bytes = sum(
        int(fp[k].size) * fp[k].dtype.itemsize
        for k in ("w1", "b1", "w2", "b2", "w3", "b3")
    )
    cost = pl.CostEstimate(
        flops=int(2 * B * (Din * H1P + H1P * H2P + H2P * DoP)),
        transcendentals=0,
        bytes_accessed=int(B * Din * 4 + B * Do * 4 + weight_bytes),
    )

    out = pl.pallas_call(
        _mlp_kernel,
        out_shape=jax.ShapeDtypeStruct((B, Do), jnp.float32),
        grid=(n_grid,),
        in_specs=in_specs,
        out_specs=out_spec,
        compiler_params=pltpu.CompilerParams(
            dimension_semantics=("parallel",)),
        cost_estimate=cost,
    )(x, fp["w1"], fp["b1"], fp["w2"], fp["b2"], fp["w3"], fp["b3"])

    return out


# ----------------------- synthetic params & reference --------------------

def init_params(key, input_dim, hid_dim, hid_dim2, output_dim):
    """Deterministic synthetic parameters (not a checkpoint load)."""
    ks = jax.random.split(key, 8)

    def lin(k, fan_in, fan_out):
        kw, kb = jax.random.split(k)
        bound = 1.0 / jnp.sqrt(fan_in)
        # stored (in, out) — transposed relative to PyTorch's (out, in)
        w = jax.random.uniform(kw, (fan_in, fan_out), jnp.float32, -bound, bound)
        b = jax.random.uniform(kb, (1, fan_out), jnp.float32, -bound, bound)
        return w, b

    w1, b1 = lin(ks[0], input_dim, hid_dim)
    w2, b2 = lin(ks[1], hid_dim, hid_dim2)
    w3, b3 = lin(ks[2], hid_dim2, output_dim)

    return dict(
        bn_gamma=jnp.ones((1, input_dim), jnp.float32),
        bn_beta=jnp.zeros((1, input_dim), jnp.float32),
        bn_mean=jax.random.normal(ks[3], (1, input_dim), jnp.float32) * 0.1,
        bn_var=jnp.abs(jax.random.normal(ks[4], (1, input_dim), jnp.float32)) + 0.5,
        w1=w1, b1=b1, w2=w2, b2=b2, w3=w3, b3=b3,
    )


def _reference_f32(x, p):
    xn = (x - p["bn_mean"]) * jax.lax.rsqrt(p["bn_var"] + BN_EPS) \
         * p["bn_gamma"] + p["bn_beta"]
    h1 = jnp.maximum(xn @ p["w1"] + p["b1"], 0.0)
    h2 = jnp.maximum(h1 @ p["w2"] + p["b2"], 0.0)
    return h2 @ p["w3"] + p["b3"]


# -------------------------------- main -----------------------------------

if __name__ == "__main__":
    # Small shapes consistent with the module's forward: x is (batch, input_dim).
    # TODO(synk): Dropout in training mode (Bernoulli masking) and BatchNorm
    #             batch-statistics (training mode) are not implemented;
    #             eval-mode (inference) semantics are used.
    batch, input_dim, hid_dim, hid_dim2, output_dim = 8, 16, 32, 24, 8

    key = jax.random.PRNGKey(0)
    k_x, k_p, k_x2 = jax.random.split(key, 3)
    x = jax.random.normal(k_x, (batch, input_dim), jnp.float32)
    raw = init_params(k_p, input_dim, hid_dim, hid_dim2, output_dim)
    fp = prepare_params(raw)

    # --- small-batch run (single ragged grid cell, TB=16 > B=8) ---
    out = jax.block_until_ready(model_simplex_short_forward(x, fp))
    ref = _reference_f32(x, raw)
    assert out.shape == (batch, output_dim)
    # bf16 MXU operands -> loosened tolerance vs f32 reference
    assert jnp.allclose(out, ref, atol=5e-2, rtol=5e-2), "mismatch vs JAX reference"

    # --- larger batch: exercises batch-grid tiling + ragged last block ---
    x2 = jax.random.normal(k_x2, (300, input_dim), jnp.float32)
    out2 = jax.block_until_ready(model_simplex_short_forward(x2, fp))
    ref2 = _reference_f32(x2, raw)
    assert out2.shape == (300, output_dim)
    assert jnp.allclose(out2, ref2, atol=5e-2, rtol=5e-2), "mismatch (batched) vs ref"

    print("KERNEL_OK")
</pallas_src>

<mosaic_0001>
module attributes {stable_mosaic.version = 11 : i64} {
  func.func @_mlp_kernel(%arg0: i32, %arg1: memref<16x16xf32, #tpu.memory_space<vmem>>, %arg2: memref<16x128xbf16, #tpu.memory_space<vmem>>, %arg3: memref<1x128xf32, #tpu.memory_space<vmem>>, %arg4: memref<128x128xbf16, #tpu.memory_space<vmem>>, %arg5: memref<1x128xf32, #tpu.memory_space<vmem>>, %arg6: memref<128x128xbf16, #tpu.memory_space<vmem>>, %arg7: memref<1x128xf32, #tpu.memory_space<vmem>>, %arg8: memref<16x8xf32, #tpu.memory_space<vmem>>) attributes {dimension_semantics = [#tpu.dimension_semantics<parallel>], iteration_bounds = array<i64: 1>, scalar_prefetch = 0 : i64, scratch_operands = 0 : i64, tpu.core_type = #tpu.core_type<tc>, window_params = [{transform_indices = @transform_0, window_bounds = array<i64: 16, 16>}, {pipeline_mode = #tpu.pipeline_mode<synchronous>, transform_indices = @transform_1, window_bounds = array<i64: 16, 128>}, {pipeline_mode = #tpu.pipeline_mode<synchronous>, transform_indices = @transform_2, window_bounds = array<i64: 1, 128>}, {pipeline_mode = #tpu.pipeline_mode<synchronous>, transform_indices = @transform_3, window_bounds = array<i64: 128, 128>}, {pipeline_mode = #tpu.pipeline_mode<synchronous>, transform_indices = @transform_4, window_bounds = array<i64: 1, 128>}, {pipeline_mode = #tpu.pipeline_mode<synchronous>, transform_indices = @transform_5, window_bounds = array<i64: 128, 128>}, {pipeline_mode = #tpu.pipeline_mode<synchronous>, transform_indices = @transform_6, window_bounds = array<i64: 1, 128>}, {transform_indices = @transform_7, window_bounds = array<i64: 16, 8>}]} {
    %c0 = arith.constant 0 : index
    %c0_0 = arith.constant 0 : index
    %0 = vector.load %arg1[%c0, %c0_0] : memref<16x16xf32, #tpu.memory_space<vmem>>, vector<16x16xf32>
    %1 = arith.truncf %0 : vector<16x16xf32> to vector<16x16xbf16>
    %c0_1 = arith.constant 0 : index
    %c0_2 = arith.constant 0 : index
    %2 = vector.load %arg2[%c0_1, %c0_2] : memref<16x128xbf16, #tpu.memory_space<vmem>>, vector<16x128xbf16>
    %cst = arith.constant dense<0.000000e+00> : vector<16x128xf32>
    %3 = tpu.matmul %1, %2, %cst {dimension_numbers = #tpu.dot_dimension_numbers<[1], [0], [0], [1], [0, 0, 1, 1], [], []>} : vector<16x16xbf16>, vector<16x128xbf16>, vector<16x128xf32> -> vector<16x128xf32>
    %c0_3 = arith.constant 0 : index
    %c0_4 = arith.constant 0 : index
    %4 = vector.load %arg3[%c0_3, %c0_4] : memref<1x128xf32, #tpu.memory_space<vmem>>, vector<1x128xf32>
    %5 = vector.broadcast %4 : vector<1x128xf32> to vector<16x128xf32>
    %6 = arith.addf %3, %5 : vector<16x128xf32>
    %cst_5 = arith.constant 0.000000e+00 : f32
    %7 = vector.broadcast %cst_5 : f32 to vector<16x128xf32>
    %8 = arith.maximumf %6, %7 : vector<16x128xf32>
    %9 = arith.truncf %8 : vector<16x128xf32> to vector<16x128xbf16>
    %c0_6 = arith.constant 0 : index
    %c0_7 = arith.constant 0 : index
    %10 = vector.load %arg4[%c0_6, %c0_7] : memref<128x128xbf16, #tpu.memory_space<vmem>>, vector<128x128xbf16>
    %cst_8 = arith.constant dense<0.000000e+00> : vector<16x128xf32>
    %11 = tpu.matmul %9, %10, %cst_8 {dimension_numbers = #tpu.dot_dimension_numbers<[1], [0], [0], [1], [0, 0, 1, 1], [], []>} : vector<16x128xbf16>, vector<128x128xbf16>, vector<16x128xf32> -> vector<16x128xf32>
    %c0_9 = arith.constant 0 : index
    %c0_10 = arith.constant 0 : index
    %12 = vector.load %arg5[%c0_9, %c0_10] : memref<1x128xf32, #tpu.memory_space<vmem>>, vector<1x128xf32>
    %13 = vector.broadcast %12 : vector<1x128xf32> to vector<16x128xf32>
    %14 = arith.addf %11, %13 : vector<16x128xf32>
    %cst_11 = arith.constant 0.000000e+00 : f32
    %15 = vector.broadcast %cst_11 : f32 to vector<16x128xf32>
    %16 = arith.maximumf %14, %15 : vector<16x128xf32>
    %17 = arith.truncf %16 : vector<16x128xf32> to vector<16x128xbf16>
    %c0_12 = arith.constant 0 : index
    %c0_13 = arith.constant 0 : index
    %18 = vector.load %arg6[%c0_12, %c0_13] : memref<128x128xbf16, #tpu.memory_space<vmem>>, vector<128x128xbf16>
    %cst_14 = arith.constant dense<0.000000e+00> : vector<16x128xf32>
    %19 = tpu.matmul %17, %18, %cst_14 {dimension_numbers = #tpu.dot_dimension_numbers<[1], [0], [0], [1], [0, 0, 1, 1], [], []>} : vector<16x128xbf16>, vector<128x128xbf16>, vector<16x128xf32> -> vector<16x128xf32>
    %c0_15 = arith.constant 0 : index
    %c0_16 = arith.constant 0 : index
    %20 = vector.load %arg7[%c0_15, %c0_16] : memref<1x128xf32, #tpu.memory_space<vmem>>, vector<1x128xf32>
    %21 = vector.broadcast %20 : vector<1x128xf32> to vector<16x128xf32>
    %22 = arith.addf %19, %21 : vector<16x128xf32>
    %23 = vector.extract_strided_slice %22 {offsets = [0, 0], sizes = [16, 8], strides = [1, 1]} : vector<16x128xf32> to vector<16x8xf32>
    %c0_17 = arith.constant 0 : index
    %c0_18 = arith.constant 0 : index
    %24 = vector.load %arg8[%c0_17, %c0_18] : memref<16x8xf32, #tpu.memory_space<vmem>>, vector<16x8xf32>
    tpu.vector_store %arg8[%c0_17, %c0_18], %23 {strides = array<i32>} : memref<16x8xf32, #tpu.memory_space<vmem>>, vector<16x8xf32>,
    return
  }
  func.func @transform_0(%arg0: i32) -> (i32, i32) {
    %c0_i32 = arith.constant 0 : i32
    %c0_i32_0 = arith.constant 0 : i32
    return %arg0, %c0_i32 : i32, i32
  }
  func.func @transform_1(%arg0: i32) -> (i32, i32) {
    %c0_i32 = arith.constant 0 : i32
    %c0_i32_0 = arith.constant 0 : i32
    %c0_i32_1 = arith.constant 0 : i32
    return %c0_i32, %c0_i32_0 : i32, i32
  }
  func.func @transform_2(%arg0: i32) -> (i32, i32) {
    %c0_i32 = arith.constant 0 : i32
    %c0_i32_0 = arith.constant 0 : i32
    %c0_i32_1 = arith.constant 0 : i32
    return %c0_i32, %c0_i32_0 : i32, i32
  }
  func.func @transform_3(%arg0: i32) -> (i32, i32) {
    %c0_i32 = arith.constant 0 : i32
    %c0_i32_0 = arith.constant 0 : i32
    %c0_i32_1 = arith.constant 0 : i32
    return %c0_i32, %c0_i32_0 : i32, i32
  }
  func.func @transform_4(%arg0: i32) -> (i32, i32) {
    %c0_i32 = arith.constant 0 : i32
    %c0_i32_0 = arith.constant 0 : i32
    %c0_i32_1 = arith.constant 0 : i32
    return %c0_i32, %c0_i32_0 : i32, i32
  }
  func.func @transform_5(%arg0: i32) -> (i32, i32) {
    %c0_i32 = arith.constant 0 : i32
    %c0_i32_0 = arith.constant 0 : i32
    %c0_i32_1 = arith.constant 0 : i32
    return %c0_i32, %c0_i32_0 : i32, i32
  }
  func.func @transform_6(%arg0: i32) -> (i32, i32) {
    %c0_i32 = arith.constant 0 : i32
    %c0_i32_0 = arith.constant 0 : i32
    %c0_i32_1 = arith.constant 0 : i32
    return %c0_i32, %c0_i32_0 : i32, i32
  }
  func.func @transform_7(%arg0: i32) -> (i32, i32) {
    %c0_i32 = arith.constant 0 : i32
    %c0_i32_0 = arith.constant 0 : i32
    return %arg0, %c0_i32 : i32, i32
  }
}

</mosaic_0001>

<llo_original>
// kernel: tpu_custom_call.1
$region0: #{tpu_custom_call.1}
  #allocation0 [shape = 'u32[]', space=smem, size = 0x4, offset = 0x4, fixed_abs, tag = 'smem constant byte address 0x4 - core index']
  #allocation1 [shape = 'u32[72,128]{1,0:T(1,128)}', space=vmem, size = 0x9000, scoped, tag = 'internal scratch']
  %s0 = inlined_call_operand.hbm [shape: f32[8,16], index: 0, kind: input, shape index: {}]
  %s1 = inlined_call_operand.hbm [shape: bf16[16,128], index: 1, kind: input, shape index: {}]
  %s2 = inlined_call_operand.vmem [shape: f32[1,128], index: 2, kind: input, shape index: {}]
  %s3 = inlined_call_operand.hbm [shape: bf16[128,128], index: 3, kind: input, shape index: {}]
  %s4 = inlined_call_operand.vmem [shape: f32[1,128], index: 4, kind: input, shape index: {}]
  %s5 = inlined_call_operand.hbm [shape: bf16[128,128], index: 5, kind: input, shape index: {}]
  %s6 = inlined_call_operand.vmem [shape: f32[1,128], index: 6, kind: input, shape index: {}]
  %s7 = inlined_call_operand.hbm [shape: f32[8,8], index: 7, kind: output, shape index: {}]
  %s8 = sld [smem:[#allocation0]]
  $region54: #{tpu_custom_call.1} parent=0
    _
  %s10 = ssub.s32 1, %s8
  %s11 = scalar_select 0, %s10, %s8
  $region1: #{tpu_custom_call.1} parent=0
    #allocation2 [shape = 'u8[8192]{0}', space=vmem, size = 0x2000, scoped, tag = 'input window, operand 0, single buffered']
    #allocation3 [shape = 's32[1]{0}', space=sflag, size = 0x4, scoped, tag = 'scoped memory for tpu_custom_call.1']
    #allocation4 [shape = 's32[1]{0}', space=sflag, size = 0x4, scoped, tag = 'scoped memory for tpu_custom_call.1']
    #allocation5 [shape = 'u8[4096]{0}', space=vmem, size = 0x1000, scoped, tag = 'input window, operand 1, single buffered']
    #allocation6 [shape = 's32[1]{0}', space=sflag, size = 0x4, scoped, tag = 'scoped memory for tpu_custom_call.1']
    #allocation7 [shape = 'u8[32768]{0}', space=vmem, size = 0x8000, scoped, tag = 'input window, operand 3, single buffered']
    #allocation8 [shape = 'u8[32768]{0}', space=vmem, size = 0x8000, scoped, tag = 'input window, operand 5, single buffered']
    #allocation9 [shape = 's32[1]{0}', space=sflag, size = 0x4, scoped, tag = 'scoped memory for tpu_custom_call.1']
    #allocation10 [shape = 'u8[8192]{0}', space=vmem, size = 0x2000, scoped, tag = 'output window, operand 0, single buffered']
    %12 = vsyncpa [#allocation3], 0
    %13 = vsyncpa [#allocation6], 0
    %14 = vsyncpa [#allocation9], 0
    %15 = vsyncpa [#allocation4], 0
    // Predicated region
    $region2: #{tpu_custom_call.1} parent=1 // pred_check
      _
    $region3: #{tpu_custom_call.1} parent=1 // pred_check_branch
      %17 = sbr.rel (0) target = $region5
    $region4: #{tpu_custom_call.1} parent=1 // pred_region
      %19 = vsyncadd [#allocation3], 128
      %s20 = sshll.u32 %s0, 4
      %s21 = int_to_ptr.hbm [resolvable:$true] %s20
      %s22 = sshll.u32 [#allocation2], 4
      %s23 = int_to_ptr.vmem [resolvable:$true] %s22
      %28 = dma.hbm_to_vmem [thread:$0]  %s21, 128, %s23, [#allocation3], 128, 128, 8
    $region5: #{tpu_custom_call.1} parent=1 // pred_fallthru
      _
    // Predicated region
    $region6: #{tpu_custom_call.1} parent=1 // pred_check
      _
    $region7: #{tpu_custom_call.1} parent=1 // pred_check_branch
      %30 = sbr.rel (0) target = $region9
    $region8: #{tpu_custom_call.1} parent=1 // pred_region
      %32 = vsyncadd [#allocation6], 0
      %s33 = sshll.u32 %s1, 4
      %s34 = int_to_ptr.hbm [resolvable:$true] %s33
      %s35 = sshll.u32 [#allocation5], 4
      %s36 = int_to_ptr.vmem [resolvable:$true] %s35
      %41 = dma.hbm_to_vmem [thread:$0]  %s34, 128, %s36, [#allocation6], 64, 64, 4
    $region9: #{tpu_custom_call.1} parent=1 // pred_fallthru
      _
    // Predicated region
    $region10: #{tpu_custom_call.1} parent=1 // pred_check
      _
    $region11: #{tpu_custom_call.1} parent=1 // pred_check_branch
      %43 = sbr.rel (0) target = $region13
    $region12: #{tpu_custom_call.1} parent=1 // pred_region
      _
    $region13: #{tpu_custom_call.1} parent=1 // pred_fallthru
      _
    // Predicated region
    $region14: #{tpu_custom_call.1} parent=1 // pred_check
      _
    $region15: #{tpu_custom_call.1} parent=1 // pred_check_branch
      %45 = sbr.rel (0) target = $region17
    $region16: #{tpu_custom_call.1} parent=1 // pred_region
      %47 = vsyncadd [#allocation6], 0
      %s48 = sshll.u32 %s3, 4
      %s49 = int_to_ptr.hbm [resolvable:$true] %s48
      %s50 = sshll.u32 [#allocation7], 4
      %s51 = int_to_ptr.vmem [resolvable:$true] %s50
      %56 = dma.hbm_to_vmem [thread:$0]  %s49, 1024, %s51, [#allocation6], 64, 64, 4
    $region17: #{tpu_custom_call.1} parent=1 // pred_fallthru
      _
    // Predicated region
    $region18: #{tpu_custom_call.1} parent=1 // pred_check
      _
    $region19: #{tpu_custom_call.1} parent=1 // pred_check_branch
      %58 = sbr.rel (0) target = $region21
    $region20: #{tpu_custom_call.1} parent=1 // pred_region
      _
    $region21: #{tpu_custom_call.1} parent=1 // pred_fallthru
      _
    // Predicated region
    $region22: #{tpu_custom_call.1} parent=1 // pred_check
      _
    $region23: #{tpu_custom_call.1} parent=1 // pred_check_branch
      %60 = sbr.rel (0) target = $region25
    $region24: #{tpu_custom_call.1} parent=1 // pred_region
      %62 = vsyncadd [#allocation9], 0
      %s63 = sshll.u32 %s5, 4
      %s64 = int_to_ptr.hbm [resolvable:$true] %s63
      %s65 = sshll.u32 [#allocation8], 4
      %s66 = int_to_ptr.vmem [resolvable:$true] %s65
      %71 = dma.hbm_to_vmem [thread:$0]  %s64, 1024, %s66, [#allocation9], 64, 64, 4
    $region25: #{tpu_custom_call.1} parent=1 // pred_fallthru
      _
    // Predicated region
    $region26: #{tpu_custom_call.1} parent=1 // pred_check
      _
    $region27: #{tpu_custom_call.1} parent=1 // pred_check_branch
      %73 = sbr.rel (0) target = $region29
    $region28: #{tpu_custom_call.1} parent=1 // pred_region
      _
    $region29: #{tpu_custom_call.1} parent=1 // pred_fallthru
      _
    // Predicated region
    $region30: #{tpu_custom_call.1} parent=1 // pred_check
      _
    $region31: #{tpu_custom_call.1} parent=1 // pred_check_branch
      %75 = sbr.rel (0) target = $region33
    $region32: #{tpu_custom_call.1} parent=1 // pred_region
      %77 = dma.done [#allocation3], 256
    $region33: #{tpu_custom_call.1} parent=1 // pred_fallthru
      _
    // Predicated region
    $region34: #{tpu_custom_call.1} parent=1 // pred_check
      _
    $region35: #{tpu_custom_call.1} parent=1 // pred_check_branch
      %79 = sbr.rel (0) target = $region37
    $region36: #{tpu_custom_call.1} parent=1 // pred_region
      %81 = dma.done [#allocation6], 128
    $region37: #{tpu_custom_call.1} parent=1 // pred_fallthru
      _
    // Predicated region
    $region38: #{tpu_custom_call.1} parent=1 // pred_check
      _
    $region39: #{tpu_custom_call.1} parent=1 // pred_check_branch
      %83 = sbr.rel (0) target = $region41
    $region40: #{tpu_custom_call.1} parent=1 // pred_region
      %85 = dma.done [#allocation6], 1024
    $region41: #{tpu_custom_call.1} parent=1 // pred_fallthru
      _
    // Predicated region
    $region42: #{tpu_custom_call.1} parent=1 // pred_check
      _
    $region43: #{tpu_custom_call.1} parent=1 // pred_check_branch
      %87 = sbr.rel (0) target = $region45
    $region44: #{tpu_custom_call.1} parent=1 // pred_region
      %89 = dma.done [#allocation9], 1024
    $region45: #{tpu_custom_call.1} parent=1 // pred_fallthru
      _
    %v91 = vld [vmem:[#allocation2] sm:$0xff]
    %v92 = vld [vmem:[#allocation2 + $0x8] sm:$0xff]
    %v93 = vpack.c.bf16 %v92, %v91
    %v94 = vld [vmem:[#allocation5] sm:$0xf]
    %v95 = vld [vmem:[#allocation5 + $0x4] sm:$0xf]
    %v96 = vld [vmem:[%s2] sm:$0x1]
    %v98 = vperm.slane %v96, 0
    %v102 = vunpack.c.l.b16 %v94
    %v103 = vunpack.c.l.b16 %v95
    %v104 = vpack.c.b16 %v103, %v102
    %vm106 = vcmask 130048
    %v108 = vsel %vm106, %v93, 0
    %110 = vmatpush.bf16.msra.mxu0 0
    %111 = vmatpush.bf16.msra.mxu0 0
    %112 = vmatpush.bf16.msra.mxu0 0
    %113 = vmatpush.bf16.msra.mxu0 0
    %114 = vmatpush.bf16.msra.mxu0 0
    %115 = vmatpush.bf16.msra.mxu0 0
    %116 = vmatpush.bf16.msra.mxu0 0
    %117 = vmatpush.bf16.msra.mxu0 %v104
    %118 = vmatmul.bf16.gmra.mxu0 %v108
    %v119 = vpop.f32.mrf.mxu0
    %v120 = vadd.f32 %v98, %v119
    %v121 = vpop.f32.mrf.mxu0
    %v122 = vadd.f32 %v98, %v121
    %123 = vdwg.mxu0
    %v124 = vmax.f32 %v120, 0.0
    %v125 = vmax.f32 %v122, 0.0
    %v126 = vpack.c.bf16 %v125, %v124
    %v127 = vld [vmem:[#allocation7] sm:$0xf]
    %v128 = vld [vmem:[#allocation7 + $0x4] sm:$0xf]
    %v129 = vld [vmem:[#allocation7 + $0x8] sm:$0xf]
    %v130 = vld [vmem:[#allocation7 + $0xc] sm:$0xf]
    %v131 = vld [vmem:[#allocation7 + $0x10] sm:$0xf]
    %v132 = vld [vmem:[#allocation7 + $0x14] sm:$0xf]
    %v133 = vld [vmem:[#allocation7 + $0x18] sm:$0xf]
    %v134 = vld [vmem:[#allocation7 + $0x1c] sm:$0xf]
    %v135 = vld [vmem:[#allocation7 + $0x20] sm:$0xf]
    %v136 = vld [vmem:[#allocation7 + $0x24] sm:$0xf]
    %v137 = vld [vmem:[#allocation7 + $0x28] sm:$0xf]
    %v138 = vld [vmem:[#allocation7 + $0x2c] sm:$0xf]
    %v139 = vld [vmem:[#allocation7 + $0x30] sm:$0xf]
    %v140 = vld [vmem:[#allocation7 + $0x34] sm:$0xf]
    %v141 = vld [vmem:[#allocation7 + $0x38] sm:$0xf]
    %v142 = vld [vmem:[#allocation7 + $0x3c] sm:$0xf]
    %v143 = vld [vmem:[%s4] sm:$0x1]
    %v145 = vperm.slane %v143, 0
    %v163 = vunpack.c.l.b16 %v127
    %v164 = vunpack.c.l.b16 %v128
    %v165 = vunpack.c.l.b16 %v129
    %v166 = vunpack.c.l.b16 %v130
    %v167 = vunpack.c.l.b16 %v131
    %v168 = vunpack.c.l.b16 %v132
    %v169 = vunpack.c.l.b16 %v133
    %v170 = vunpack.c.l.b16 %v134
    %v171 = vunpack.c.l.b16 %v135
    %v172 = vunpack.c.l.b16 %v136
    %v173 = vunpack.c.l.b16 %v137
    %v174 = vunpack.c.l.b16 %v138
    %v175 = vunpack.c.l.b16 %v139
    %v176 = vunpack.c.l.b16 %v140
    %v177 = vunpack.c.l.b16 %v141
    %v178 = vunpack.c.l.b16 %v142
    %v179 = vpack.c.b16 %v164, %v163
    %v180 = vpack.c.b16 %v166, %v165
    %v181 = vpack.c.b16 %v168, %v167
    %v182 = vpack.c.b16 %v170, %v169
    %v183 = vpack.c.b16 %v172, %v171
    %v184 = vpack.c.b16 %v174, %v173
    %v185 = vpack.c.b16 %v176, %v175
    %v186 = vpack.c.b16 %v178, %v177
    %195 = vmatpush.bf16.msra.mxu0 %v186
    %196 = vmatpush.bf16.msra.mxu0 %v185
    %197 = vmatpush.bf16.msra.mxu0 %v184
    %198 = vmatpush.bf16.msra.mxu0 %v183
    %199 = vmatpush.bf16.msra.mxu0 %v182
    %200 = vmatpush.bf16.msra.mxu0 %v181
    %201 = vmatpush.bf16.msra.mxu0 %v180
    %202 = vmatpush.bf16.msra.mxu0 %v179
    %203 = vmatmul.bf16.gmra.mxu0 %v126
    %v204 = vpop.f32.mrf.mxu0
    %v205 = vadd.f32 %v145, %v204
    %v206 = vpop.f32.mrf.mxu0
    %v207 = vadd.f32 %v145, %v206
    %208 = vdwg.mxu0
    %v209 = vmax.f32 %v205, 0.0
    %v210 = vmax.f32 %v207, 0.0
    %v211 = vpack.c.bf16 %v210, %v209
    %v212 = vld [vmem:[#allocation8] sm:$0xf]
    %v213 = vld [vmem:[#allocation8 + $0x4] sm:$0xf]
    %v214 = vld [vmem:[#allocation8 + $0x8] sm:$0xf]
    %v215 = vld [vmem:[#allocation8 + $0xc] sm:$0xf]
    %v216 = vld [vmem:[#allocation8 + $0x10] sm:$0xf]
    %v217 = vld [vmem:[#allocation8 + $0x14] sm:$0xf]
    %v218 = vld [vmem:[#allocation8 + $0x18] sm:$0xf]
    %v219 = vld [vmem:[#allocation8 + $0x1c] sm:$0xf]
    %v220 = vld [vmem:[#allocation8 + $0x20] sm:$0xf]
    %v221 = vld [vmem:[#allocation8 + $0x24] sm:$0xf]
    %v222 = vld [vmem:[#allocation8 + $0x28] sm:$0xf]
    %v223 = vld [vmem:[#allocation8 + $0x2c] sm:$0xf]
    %v224 = vld [vmem:[#allocation8 + $0x30] sm:$0xf]
    %v225 = vld [vmem:[#allocation8 + $0x34] sm:$0xf]
    %v226 = vld [vmem:[#allocation8 + $0x38] sm:$0xf]
    %v227 = vld [vmem:[#allocation8 + $0x3c] sm:$0xf]
    %v228 = vld [vmem:[%s6] sm:$0x1]
    %v230 = vperm.slane %v228, 0
    %v248 = vunpack.c.l.b16 %v212
    %v249 = vunpack.c.l.b16 %v213
    %v250 = vunpack.c.l.b16 %v214
    %v251 = vunpack.c.l.b16 %v215
    %v252 = vunpack.c.l.b16 %v216
    %v253 = vunpack.c.l.b16 %v217
    %v254 = vunpack.c.l.b16 %v218
    %v255 = vunpack.c.l.b16 %v219
    %v256 = vunpack.c.l.b16 %v220
    %v257 = vunpack.c.l.b16 %v221
    %v258 = vunpack.c.l.b16 %v222
    %v259 = vunpack.c.l.b16 %v223
    %v260 = vunpack.c.l.b16 %v224
    %v261 = vunpack.c.l.b16 %v225
    %v262 = vunpack.c.l.b16 %v226
    %v263 = vunpack.c.l.b16 %v227
    %v264 = vpack.c.b16 %v249, %v248
    %v265 = vpack.c.b16 %v251, %v250
    %v266 = vpack.c.b16 %v253, %v252
    %v267 = vpack.c.b16 %v255, %v254
    %v268 = vpack.c.b16 %v257, %v256
    %v269 = vpack.c.b16 %v259, %v258
    %v270 = vpack.c.b16 %v261, %v260
    %v271 = vpack.c.b16 %v263, %v262
    %280 = vmatpush.bf16.msra.mxu0 %v271
    %281 = vmatpush.bf16.msra.mxu0 %v270
    %282 = vmatpush.bf16.msra.mxu0 %v269
    %283 = vmatpush.bf16.msra.mxu0 %v268
    %284 = vmatpush.bf16.msra.mxu0 %v267
    %285 = vmatpush.bf16.msra.mxu0 %v266
    %286 = vmatpush.bf16.msra.mxu0 %v265
    %287 = vmatpush.bf16.msra.mxu0 %v264
    %288 = vmatmul.bf16.gmra.mxu0 %v211
    %v289 = vpop.f32.mrf.mxu0
    %v290 = vadd.f32 %v230, %v289
    %v291 = vpop.f32.mrf.mxu0
    %v292 = vadd.f32 %v230, %v291
    %293 = vdwg.mxu0
    %vm294 = vcmask 64512
    %295 = vst.msk [vmem:[#allocation10] sm:$0xff] %vm294, %v290
    %296 = vst.msk [vmem:[#allocation10 + $0x8] sm:$0xff] %vm294, %v292
    // Predicated region
    $region46: #{tpu_custom_call.1} parent=1 // pred_check
      _
    $region47: #{tpu_custom_call.1} parent=1 // pred_check_branch
      %298 = sbr.rel (0) target = $region49
    $region48: #{tpu_custom_call.1} parent=1 // pred_region
      %300 = vsyncadd [#allocation4], 128
      %s301 = sshll.u32 [#allocation10], 4
      %s302 = int_to_ptr.vmem [resolvable:$true] %s301
      %s303 = sshll.u32 %s7, 4
      %s304 = int_to_ptr.hbm [resolvable:$true] %s303
      %309 = dma.vmem_to_hbm [thread:$0]  %s302, 128, %s304, [#allocation4], 128, 128, 8
    $region49: #{tpu_custom_call.1} parent=1 // pred_fallthru
      _
    // Predicated region
    $region50: #{tpu_custom_call.1} parent=1 // pred_check
      _
    $region51: #{tpu_custom_call.1} parent=1 // pred_check_branch
      %311 = sbr.rel (0) target = $region53
    $region52: #{tpu_custom_call.1} parent=1 // pred_region
      %313 = dma.done [#allocation4], 256
    $region53: #{tpu_custom_call.1} parent=1 // pred_fallthru
      _
    %314 = vsyncpa [#allocation3], 1
    %315 = vsyncpa [#allocation6], 1
    %316 = vsyncpa [#allocation9], 1
    %317 = vsyncpa [#allocation4], 1

</llo_original>
